<compile_context>
chip_gen: v7x
topology: tpu7x:2x2x1
jax: 0.10.0
libtpu: 0.0.40
codegen_flags: <defaults>
</compile_context>

<pallas_src>
import jax
import jax.numpy as jnp
from jax import lax
from jax.experimental import pallas as pl
from jax.experimental.pallas import tpu as pltpu


def _round_up(v, m):
    return ((v + m - 1) // m) * m


def _vmem_capacity_bytes():
    try:
        return int(pltpu.get_tpu_info().vmem_capacity_bytes)
    except Exception:
        return 64 * 1024 * 1024  # conservative (v7x-sized) fallback


def _cos_sim_kernel(x_ref, yT_ref, inv_x_ref, inv_y_ref, o_ref):
    """Full-depth tile: one MXU dot + two broadcast VPU multiplies (norms pre-hoisted)."""
    dots = jnp.dot(x_ref[...], yT_ref[...], preferred_element_type=jnp.float32)
    o_ref[...] = (dots * inv_x_ref[...] * inv_y_ref[...]).astype(o_ref.dtype)


def _cos_sim_kernel_ktiled(x_ref, yT_ref, inv_x_ref, inv_y_ref, o_ref, acc_ref):
    """K-tiled variant: accumulate (tm,tk)@(tk,tn) into f32 scratch, scale in the epilogue."""
    k = pl.program_id(2)

    @pl.when(k == 0)
    def _():
        acc_ref[...] = jnp.zeros_like(acc_ref)

    acc_ref[...] += jnp.dot(x_ref[...], yT_ref[...], preferred_element_type=jnp.float32)

    @pl.when(k == pl.num_programs(2) - 1)
    def _():
        o_ref[...] = (acc_ref[...] * inv_x_ref[...] * inv_y_ref[...]).astype(o_ref.dtype)


def _auto_tiles(bx, by, hp, itemsize, sub, vmem_cap):
    """Pick (tm, tn, tk) given shapes, compute dtype itemsize and VMEM capacity."""
    bx_s = _round_up(max(bx, 1), sub)
    by128 = _round_up(max(by, 1), 128)

    work_budget = vmem_cap // 2        # target for the pipelined working set
    resident_budget = vmem_cap // 8    # ~16 MiB on 128-MiB parts, ~8 MiB on v7x

    def need(tm, tn, tk):
        return (2 * (tm * tk + tk * tn) * itemsize   # double-buffered streamed inputs
                + 3 * tm * tn * 4                    # output double-buffer + f32 accumulator
                + 2 * (tm + tn) * 4)                 # inv_x / inv_y side inputs

    tm_cands = [c for c in (1024, 512, 256, 128) if c <= bx_s] or [bx_s]
    tn_cands = [c for c in (512, 384, 256, 128) if c <= by128] or [by128]

    # Resident-y fast path: keep all of yT (+ inv_y) in VMEM, stream only x row tiles.
    y_bytes = by128 * hp * itemsize + by128 * 4
    if y_bytes <= resident_budget:
        for tm in tm_cands:
            if need(tm, by128, hp) <= work_budget:
                if _round_up(bx, tm) // tm < 2 and bx > sub:
                    tm = _round_up(-(-bx // 2), sub)   # >=2 row tiles -> both v7x cores busy
                return tm, by128, hp

    # Streamed-y path: tn minimizing y-side padding waste, largest tm with full-depth blocks.
    tn = min(tn_cands, key=lambda c: (_round_up(by, c) - by, -c))
    for tm in tm_cands:
        if need(tm, tn, hp) <= work_budget:
            return tm, tn, hp

    # K-tiled path: hidden dim too large for full-depth blocks; tile the contraction dim.
    tm = min(256, bx_s)
    n128 = hp // 128
    for d in sorted((d for d in range(1, n128 + 1) if n128 % d == 0), reverse=True):
        tk = d * 128
        if need(tm, tn, tk) <= work_budget:
            return tm, tn, tk
    return tm, tn, 128


def similarity(x, y, temp, *, eps=1e-8, downcast_f32_to_bf16=True, out_dtype=jnp.float32,
               tm=None, tn=None, tk=None, y_buffer_count=2):
    """Pallas equivalent of Similarity(temp)(x, y) for the broadcasted SimCSE case.

    x: (Bx, 1, H) or (Bx, H);  y: (1, By, H) or (By, H)  ->  (Bx, By) `out_dtype`.
    """
    if x.ndim == 3:
        x = x.reshape(x.shape[0], x.shape[-1])
    if y.ndim == 3:
        y = y.reshape(y.shape[-2], y.shape[-1])
    bx, h = x.shape
    by, hy = y.shape
    assert h == hy, "last (feature) dims must match"

    # Hoisted f32 epilogue factors (computed once from the un-padded, un-cast inputs):
    #   inv_x = 1/max(||x||, eps),  inv_y = 1/(max(||y||, eps) * temp)
    x32 = x.astype(jnp.float32)
    y32 = y.astype(jnp.float32)
    inv_x = lax.rsqrt(jnp.maximum(jnp.sum(x32 * x32, axis=-1, keepdims=True), eps * eps))
    inv_y = (lax.rsqrt(jnp.maximum(jnp.sum(y32 * y32, axis=-1), eps * eps))
             * (1.0 / float(temp)))[None, :]

    # MXU compute dtype: keep native dtype; optionally downcast f32 -> bf16 (norms stay f32).
    cd = jnp.result_type(x.dtype, y.dtype)
    if downcast_f32_to_bf16 and cd == jnp.float32:
        cd = jnp.bfloat16
    itemsize = jnp.dtype(cd).itemsize
    sub = max(8, 32 // itemsize)          # sublane alignment: 8 (f32) / 16 (bf16) / 32 (int8)

    vmem_cap = _vmem_capacity_bytes()
    hp = _round_up(h, 128)
    a_tm, a_tn, a_tk = _auto_tiles(bx, by, hp, itemsize, sub, vmem_cap)
    tm = a_tm if tm is None else max(sub, _round_up(int(tm), sub))
    tn = a_tn if tn is None else min(_round_up(by, 128), max(128, _round_up(int(tn), 128)))
    tk = a_tk if tk is None else max(128, _round_up(int(tk), 128))
    hp = _round_up(hp, tk)

    bxp = _round_up(bx, tm)
    byp = _round_up(by, tn)
    grid_m, grid_n, grid_k = bxp // tm, byp // tn, hp // tk

    # One-shot layout plumbing; skip materialized pad copies when already aligned.
    def pad2(a, rows, cols):
        if a.shape == (rows, cols):
            return a
        return jnp.zeros((rows, cols), a.dtype).at[:a.shape[0], :a.shape[1]].set(a)

    xp = pad2(x.astype(cd), bxp, hp)
    yTp = pad2(y.astype(cd).T, hp, byp)
    inv_xp = pad2(inv_x, bxp, 1)
    inv_yp = pad2(inv_y, 1, byp)

    # Explicit scoped-VMEM limit derived from the chosen tiles.
    need = 2 * (tm * tk + tk * tn) * itemsize + 3 * tm * tn * 4 + 2 * (tm + tn) * 4
    vmem_limit = int(min(0.75 * vmem_cap, max(need + (8 << 20), 32 << 20)))
    vmem_limit = max(vmem_limit, need + (2 << 20))

    if grid_k > 1:
        grid = (grid_m, grid_n, grid_k)
        in_specs = [
            pl.BlockSpec((tm, tk), lambda i, j, k: (i, k)),      # x row/depth tile
            pl.BlockSpec((tk, tn), lambda i, j, k: (k, j)),      # yT depth/col tile
            pl.BlockSpec((tm, 1), lambda i, j, k: (i, 0)),       # hoisted inv ||x||
            pl.BlockSpec((1, tn), lambda i, j, k: (0, j)),       # hoisted inv ||y|| / temp
        ]
        out_specs = pl.BlockSpec((tm, tn), lambda i, j, k: (i, j))
        scratch = [pltpu.VMEM((tm, tn), jnp.float32)]
        dims = ("parallel", "parallel", "arbitrary")
        kernel = _cos_sim_kernel_ktiled
    else:
        grid = (grid_m, grid_n)
        y_kwargs = {}
        if y_buffer_count > 2 and grid_n > 1:
            # Deeper pipelining for the only operand whose block changes every grid step.
            y_kwargs = dict(pipeline_mode=pl.Buffered(int(y_buffer_count)))
        in_specs = [
            pl.BlockSpec((tm, hp), lambda i, j: (i, 0)),
            pl.BlockSpec((hp, tn), lambda i, j: (0, j), **y_kwargs),
            pl.BlockSpec((tm, 1), lambda i, j: (i, 0)),
            pl.BlockSpec((1, tn), lambda i, j: (0, j)),
        ]
        out_specs = pl.BlockSpec((tm, tn), lambda i, j: (i, j))
        scratch = []
        dims = ("parallel", "parallel")
        kernel = _cos_sim_kernel

    out = pl.pallas_call(
        kernel,
        out_shape=jax.ShapeDtypeStruct((bxp, byp), out_dtype),
        grid_spec=pltpu.PrefetchScalarGridSpec(
            num_scalar_prefetch=0,
            grid=grid,
            in_specs=in_specs,
            out_specs=out_specs,
            scratch_shapes=scratch,
        ),
        compiler_params=pltpu.CompilerParams(
            dimension_semantics=dims,
            vmem_limit_bytes=vmem_limit,
        ),
    )(xp, yTp, inv_xp, inv_yp)

    if (bxp, byp) != (bx, by):
        out = out[:bx, :by]
    return out


if __name__ == "__main__":
    key = jax.random.PRNGKey(0)
    k1, k2, k3, k4 = jax.random.split(key, 4)

    def ref_similarity(x2, y2, temp, eps=1e-8):
        x2 = x2.astype(jnp.float32)
        y2 = y2.astype(jnp.float32)
        xn = jnp.maximum(jnp.linalg.norm(x2, axis=-1, keepdims=True), eps)
        yn = jnp.maximum(jnp.linalg.norm(y2, axis=-1, keepdims=True), eps)
        return (x2 @ y2.T) / (xn * yn.T) / temp

    # Case 1: SimCSE-style broadcasted f32 inputs, exact f32 MXU path, auto tiling
    # (resident-y fast path, >=2 row tiles).
    B, H = 16, 32
    temp = 0.05
    x = jax.random.normal(k1, (B, 1, H), dtype=jnp.float32)
    y = jax.random.normal(k2, (1, B, H), dtype=jnp.float32)
    out1 = jax.block_until_ready(similarity(x, y, temp, downcast_f32_to_bf16=False))
    ref1 = ref_similarity(x.reshape(B, H), y.reshape(B, H), temp)
    assert out1.shape == (B, B)
    assert jnp.allclose(out1, ref1, atol=2e-3, rtol=2e-3), "case 1 mismatch vs reference"

    # Case 2: default precision path (f32 inputs downcast to bf16 on the MXU, f32 norms/acc).
    out2 = jax.block_until_ready(similarity(x, y, temp))
    assert jnp.allclose(out2, ref1, atol=1e-1, rtol=5e-2), "case 2 mismatch vs reference"

    # Case 3: bf16 inputs, forced small tiles -> streamed-y, K-tiled accumulator path with
    # padding in every dimension.
    bx2, by2, h2 = 24, 200, 300
    temp2 = 0.07
    xb = jax.random.normal(k3, (bx2, h2), dtype=jnp.bfloat16)
    yb = jax.random.normal(k4, (by2, h2), dtype=jnp.bfloat16)
    out3 = jax.block_until_ready(similarity(xb, yb, temp2, tm=16, tn=128, tk=128))
    ref3 = ref_similarity(xb, yb, temp2)
    assert out3.shape == (bx2, by2)
    assert jnp.allclose(out3, ref3, atol=2e-3, rtol=2e-3), "case 3 mismatch vs reference"

    print("KERNEL_OK")
</pallas_src>

<mosaic_0001>
module attributes {stable_mosaic.version = 11 : i64} {
  func.func @_cos_sim_kernel(%arg0: i32, %arg1: i32, %arg2: memref<8x128xf32, #tpu.memory_space<vmem>>, %arg3: memref<128x128xf32, #tpu.memory_space<vmem>>, %arg4: memref<8x1xf32, #tpu.memory_space<vmem>>, %arg5: memref<1x128xf32, #tpu.memory_space<vmem>>, %arg6: memref<8x128xf32, #tpu.memory_space<vmem>>) attributes {dimension_semantics = [#tpu.dimension_semantics<parallel>, #tpu.dimension_semantics<parallel>], iteration_bounds = array<i64: 2, 1>, scalar_prefetch = 0 : i64, scratch_operands = 0 : i64, tpu.core_type = #tpu.core_type<tc>, window_params = [{transform_indices = @transform_0, window_bounds = array<i64: 8, 128>}, {transform_indices = @transform_1, window_bounds = array<i64: 128, 128>}, {transform_indices = @transform_2, window_bounds = array<i64: 8, 1>}, {transform_indices = @transform_3, window_bounds = array<i64: 1, 128>}, {transform_indices = @transform_4, window_bounds = array<i64: 8, 128>}]} {
    %c0 = arith.constant 0 : index
    %c0_0 = arith.constant 0 : index
    %0 = vector.load %arg2[%c0, %c0_0] : memref<8x128xf32, #tpu.memory_space<vmem>>, vector<8x128xf32>
    %c0_1 = arith.constant 0 : index
    %c0_2 = arith.constant 0 : index
    %1 = vector.load %arg3[%c0_1, %c0_2] : memref<128x128xf32, #tpu.memory_space<vmem>>, vector<128x128xf32>
    %cst = arith.constant dense<0.000000e+00> : vector<8x128xf32>
    %2 = tpu.matmul %0, %1, %cst {dimension_numbers = #tpu.dot_dimension_numbers<[1], [0], [0], [1], [0, 0, 1, 1], [], []>} : vector<8x128xf32>, vector<128x128xf32>, vector<8x128xf32> -> vector<8x128xf32>
    %c0_3 = arith.constant 0 : index
    %c0_4 = arith.constant 0 : index
    %3 = vector.load %arg4[%c0_3, %c0_4] : memref<8x1xf32, #tpu.memory_space<vmem>>, vector<8x1xf32>
    %4 = vector.broadcast %3 : vector<8x1xf32> to vector<8x128xf32>
    %5 = arith.mulf %2, %4 : vector<8x128xf32>
    %c0_5 = arith.constant 0 : index
    %c0_6 = arith.constant 0 : index
    %6 = vector.load %arg5[%c0_5, %c0_6] : memref<1x128xf32, #tpu.memory_space<vmem>>, vector<1x128xf32>
    %7 = vector.broadcast %6 : vector<1x128xf32> to vector<8x128xf32>
    %8 = arith.mulf %5, %7 : vector<8x128xf32>
    %c0_7 = arith.constant 0 : index
    %c0_8 = arith.constant 0 : index
    %9 = vector.load %arg6[%c0_7, %c0_8] : memref<8x128xf32, #tpu.memory_space<vmem>>, vector<8x128xf32>
    tpu.vector_store %arg6[%c0_7, %c0_8], %8 {strides = array<i32>} : memref<8x128xf32, #tpu.memory_space<vmem>>, vector<8x128xf32>,
    return
  }
  func.func @transform_0(%arg0: i32, %arg1: i32) -> (i32, i32) {
    %c0_i32 = arith.constant 0 : i32
    %c0_i32_0 = arith.constant 0 : i32
    return %arg0, %c0_i32 : i32, i32
  }
  func.func @transform_1(%arg0: i32, %arg1: i32) -> (i32, i32) {
    %c0_i32 = arith.constant 0 : i32
    %c0_i32_0 = arith.constant 0 : i32
    return %c0_i32, %arg1 : i32, i32
  }
  func.func @transform_2(%arg0: i32, %arg1: i32) -> (i32, i32) {
    %c0_i32 = arith.constant 0 : i32
    %c0_i32_0 = arith.constant 0 : i32
    return %arg0, %c0_i32 : i32, i32
  }
  func.func @transform_3(%arg0: i32, %arg1: i32) -> (i32, i32) {
    %c0_i32 = arith.constant 0 : i32
    %c0_i32_0 = arith.constant 0 : i32
    return %c0_i32, %arg1 : i32, i32
  }
  func.func @transform_4(%arg0: i32, %arg1: i32) -> (i32, i32) {
    %c0_i32 = arith.constant 0 : i32
    return %arg0, %arg1 : i32, i32
  }
}

</mosaic_0001>

<llo_original>
// kernel: tpu_custom_call.1
$region0: #{tpu_custom_call.1}
  #allocation0 [shape = 'u32[]', space=smem, size = 0x4, offset = 0x4, fixed_abs, tag = 'smem constant byte address 0x4 - core index']
  #allocation1 [shape = 'u32[144,128]{1,0:T(1,128)}', space=vmem, size = 0x12000, scoped, tag = 'internal scratch']
  %s0 = inlined_call_operand.vmem [shape: f32[16,128], index: 0, kind: input, shape index: {}]
  %s1 = inlined_call_operand.hbm [shape: f32[128,128], index: 1, kind: input, shape index: {}]
  %s2 = inlined_call_operand.vmem [shape: f32[16,1], index: 2, kind: input, shape index: {}]
  %s3 = inlined_call_operand.vmem [shape: f32[1,128], index: 3, kind: input, shape index: {}]
  %s4 = inlined_call_operand.hbm [shape: f32[16,128], index: 4, kind: output, shape index: {}]
  %s5 = sld [smem:[#allocation0]]
  $region53: #{tpu_custom_call.1} parent=0
    _
  %s7 = ssub.s32 1, %s5
  %s8 = scalar_select 0, %s7, %s5
  $region1: #{tpu_custom_call.1} parent=0
    #allocation2 [shape = 'u8[65536]{0}', space=vmem, size = 0x10000, scoped, tag = 'input window, operand 1, single buffered']
    #allocation3 [shape = 's32[2]{0}', space=sflag, size = 0x8, scoped, tag = 'scoped memory for tpu_custom_call.1']
    #allocation4 [shape = 's32[2]{0}', space=sflag, size = 0x8, scoped, tag = 'scoped memory for tpu_custom_call.1']
    #allocation5 [shape = 'u8[8192]{0}', space=vmem, size = 0x2000, scoped, tag = 'output window, operand 0']
    %9 = vsyncpa [#allocation3], 0
    %10 = vsyncpa [#allocation4], 0
    %s11 = scalar_lea.sflag [#allocation4], 1
    %12 = vsyncpa %s11, 0
    loop: start=0, step=1, limit=4
    $region2: #{tpu_custom_call.1} parent=1 // loop_pre_header
      _
    $region3: #{tpu_custom_call.1} parent=1 // loop_header
      %s14 = sphi 0, %s18
      %p15 = scmp.ge.s32.totalorder %s14, 4
      %s21 = sphi 0, %s33
      %s22 = sphi 0, %s29
      %s23 = sphi 0, %s21
      %s24 = sphi 0, %s22
      %s25 = sphi 0, %s23
      %s26 = sphi 0, %s24
      %s36 = sphi 0, %s38
      %s39 = sphi 0, %s36
      %s40 = sphi 0, %s39
      %s56 = sphi 0, %s40
      %s62 = sphi 0, %s64
      %s65 = sphi 0, %s62
      %s66 = sphi 0, %s65
      %s82 = sphi 0, %s66
      %s88 = sphi 0, %s90
      %s91 = sphi 0, %s88
      %s92 = sphi 0, %s91
      %s108 = sphi 0, %s92
      %s114 = sphi 0, %s116
      %s117 = sphi 0, %s114
      %s118 = sphi 0, %s117
      %s134 = sphi 0, %s118
      %s142 = sphi 0, %s144
      %s145 = sphi 0, %s142
      %s146 = sphi 0, %s145
      %s162 = sphi 0, %s146
    $region4: #{tpu_custom_call.1} parent=1 // loop_header_branch
      %17 = sbr.rel (%p15) target = $region8
    $region5: #{tpu_custom_call.1} parent=1 // loop_body
      %s19 = ssub.s32 %s14, 1
      %s20 = ssub.s32 %s14, 2
      %s27 = sadd.s32 1, %s22
      %p28 = scmp.ge.s32.totalorder %s27, 1
      %s29 = scalar_select %p28, 0, %s27
      %s30 = sadd.s32 1, %s21
      %s31 = scalar_select %p28, %s30, %s21
      %p32 = scmp.ge.s32.totalorder %s31, 2
      %s33 = scalar_select %p32, 0, %s31
      %s34 = ssub.s32 %s21, %s33
      %p35 = scmp.eq.s32.totalorder %s34, 0
      %s37 = sadd.s32 %s36, 1
      %s38 = scalar_select %p35, %s36, %s37
      %p41 = pneg %p35
      %p42 = scmp.eq.s32.totalorder %s14, 1
      %p43 = por %p41, %p42
      %p44 = scmp.ne.s32.totalorder %s36, %s39
      %p45 = scmp.eq.s32.totalorder %s14, 0
      %p46 = por %p44, %p45
      %p47 = scmp.ne.s32.totalorder %s36, %s39
      %p48 = scmp.eq.s32.totalorder %s19, 1
      %p49 = por %p47, %p48
      %p50 = scmp.ne.s32.totalorder %s39, %s40
      %p51 = scmp.eq.s32.totalorder %s19, 0
      %p52 = por %p50, %p51
      %p53 = scmp.ne.s32.totalorder %s39, %s40
      %p54 = scmp.eq.s32.totalorder %s20, 1
      %p55 = por %p53, %p54
      %p57 = scmp.ne.s32.totalorder %s40, %s56
      %p58 = scmp.eq.s32.totalorder %s20, 0
      %p59 = por %p57, %p58
      %s60 = ssub.s32 %s22, %s29
      %p61 = scmp.eq.s32.totalorder %s60, 0
      %s63 = sadd.s32 %s62, 1
      %s64 = scalar_select %p61, %s62, %s63
      %p67 = pneg %p61
      %p68 = scmp.eq.s32.totalorder %s14, 1
      %p69 = por %p67, %p68
      %p70 = scmp.ne.s32.totalorder %s62, %s65
      %p71 = scmp.eq.s32.totalorder %s14, 0
      %p72 = por %p70, %p71
      %p73 = scmp.ne.s32.totalorder %s62, %s65
      %p74 = scmp.eq.s32.totalorder %s19, 1
      %p75 = por %p73, %p74
      %p76 = scmp.ne.s32.totalorder %s65, %s66
      %p77 = scmp.eq.s32.totalorder %s19, 0
      %p78 = por %p76, %p77
      %p79 = scmp.ne.s32.totalorder %s65, %s66
      %p80 = scmp.eq.s32.totalorder %s20, 1
      %p81 = por %p79, %p80
      %p83 = scmp.ne.s32.totalorder %s66, %s82
      %p84 = scmp.eq.s32.totalorder %s20, 0
      %p85 = por %p83, %p84
      %s86 = ssub.s32 %s21, %s33
      %p87 = scmp.eq.s32.totalorder %s86, 0
      %s89 = sadd.s32 %s88, 1
      %s90 = scalar_select %p87, %s88, %s89
      %p93 = pneg %p87
      %p94 = scmp.eq.s32.totalorder %s14, 1
      %p95 = por %p93, %p94
      %p96 = scmp.ne.s32.totalorder %s88, %s91
      %p97 = scmp.eq.s32.totalorder %s14, 0
      %p98 = por %p96, %p97
      %p99 = scmp.ne.s32.totalorder %s88, %s91
      %p100 = scmp.eq.s32.totalorder %s19, 1
      %p101 = por %p99, %p100
      %p102 = scmp.ne.s32.totalorder %s91, %s92
      %p103 = scmp.eq.s32.totalorder %s19, 0
      %p104 = por %p102, %p103
      %p105 = scmp.ne.s32.totalorder %s91, %s92
      %p106 = scmp.eq.s32.totalorder %s20, 1
      %p107 = por %p105, %p106
      %p109 = scmp.ne.s32.totalorder %s92, %s108
      %p110 = scmp.eq.s32.totalorder %s20, 0
      %p111 = por %p109, %p110
      %s112 = ssub.s32 %s22, %s29
      %p113 = scmp.eq.s32.totalorder %s112, 0
      %s115 = sadd.s32 %s114, 1
      %s116 = scalar_select %p113, %s114, %s115
      %p119 = pneg %p113
      %p120 = scmp.eq.s32.totalorder %s14, 1
      %p121 = por %p119, %p120
      %p122 = scmp.ne.s32.totalorder %s114, %s117
      %p123 = scmp.eq.s32.totalorder %s14, 0
      %p124 = por %p122, %p123
      %p125 = scmp.ne.s32.totalorder %s114, %s117
      %p126 = scmp.eq.s32.totalorder %s19, 1
      %p127 = por %p125, %p126
      %p128 = scmp.ne.s32.totalorder %s117, %s118
      %p129 = scmp.eq.s32.totalorder %s19, 0
      %p130 = por %p128, %p129
      %p131 = scmp.ne.s32.totalorder %s117, %s118
      %p132 = scmp.eq.s32.totalorder %s20, 1
      %p133 = por %p131, %p132
      %p135 = scmp.ne.s32.totalorder %s118, %s134
      %p136 = scmp.eq.s32.totalorder %s20, 0
      %p137 = por %p135, %p136
      %s138 = ssub.s32 %s21, %s33
      %s139 = ssub.s32 %s22, %s29
      %s140 = sor.u32 %s138, %s139
      %p141 = scmp.eq.s32.totalorder %s140, 0
      %s143 = sadd.s32 %s142, 1
      %s144 = scalar_select %p141, %s142, %s143
      %p147 = pneg %p141
      %p148 = scmp.eq.s32.totalorder %s14, 1
      %p149 = por %p147, %p148
      %p150 = scmp.ne.s32.totalorder %s142, %s145
      %p151 = scmp.eq.s32.totalorder %s14, 0
      %p152 = por %p150, %p151
      %p153 = scmp.ne.s32.totalorder %s142, %s145
      %p154 = scmp.eq.s32.totalorder %s19, 1
      %p155 = por %p153, %p154
      %p156 = scmp.ne.s32.totalorder %s145, %s146
      %p157 = scmp.eq.s32.totalorder %s19, 0
      %p158 = por %p156, %p157
      %p159 = scmp.ne.s32.totalorder %s145, %s146
      %p160 = scmp.eq.s32.totalorder %s20, 1
      %p161 = por %p159, %p160
      %p163 = scmp.ne.s32.totalorder %s146, %s162
      %p164 = scmp.eq.s32.totalorder %s20, 0
      %p165 = por %p163, %p164
      %p166 = scmp.le.s32.totalorder 1, %s14
      %p167 = scmp.lt.s32.totalorder %s14, 3
      %p168 = pnand %p166, %p167
      %p169 = pneg %p168
      // Predicated region
      $region9: #{tpu_custom_call.1} parent=5 // pred_check
        _
      $region10: #{tpu_custom_call.1} parent=5 // pred_check_branch
        %171 = sbr.rel (%p168) target = $region12
      $region11: #{tpu_custom_call.1} parent=5 // pred_region
        %s172 = ssub.s32 %s14, 1
        // Predicated region
        $region13: #{tpu_custom_call.1} parent=11 // pred_check
          %p173 = pneg %p78
        $region14: #{tpu_custom_call.1} parent=11 // pred_check_branch
          %175 = sbr.rel (%p173) target = $region16
        $region15: #{tpu_custom_call.1} parent=11 // pred_region
          %s177 = ssub.s32 2048, 2048
          %178 = vsyncadd [#allocation3], %s177
          %s179 = smul.addr %s24, 128
          %s180 = scalar_lea.hbm %s1, %s179
          %s181 = sshll.u32 [#allocation2], 4
          %s182 = int_to_ptr.vmem [resolvable:$true] %s181
          %187 = dma.hbm_to_vmem [thread:$0]  %s180, 2048, %s182, [#allocation3], 128, 128, 8
        $region16: #{tpu_custom_call.1} parent=11 // pred_fallthru
          _
        // Predicated region
        $region17: #{tpu_custom_call.1} parent=11 // pred_check
          %p188 = pneg %p130
        $region18: #{tpu_custom_call.1} parent=11 // pred_check_branch
          %190 = sbr.rel (%p188) target = $region20
        $region19: #{tpu_custom_call.1} parent=11 // pred_region
          %p191 = scmp.lt.s32.totalorder %s24, 0
          %s192 = scalar_select %p191, %s24, 0
          %s193 = scalar_lea.vmem %s3, %s192
        $region20: #{tpu_custom_call.1} parent=11 // pred_fallthru
          _
      $region12: #{tpu_custom_call.1} parent=5 // pred_fallthru
        _
      %p194 = scmp.lt.s32.totalorder %s14, 2
      // Predicated region
      $region21: #{tpu_custom_call.1} parent=5 // pred_check
        %p195 = pneg %p194
      $region22: #{tpu_custom_call.1} parent=5 // pred_check_branch
        %197 = sbr.rel (%p195) target = $region24
      $region23: #{tpu_custom_call.1} parent=5 // pred_region
        // Predicated region
        $region25: #{tpu_custom_call.1} parent=23 // pred_check
          %p198 = pneg %p46
        $region26: #{tpu_custom_call.1} parent=23 // pred_check_branch
          %200 = sbr.rel (%p198) target = $region28
        $region27: #{tpu_custom_call.1} parent=23 // pred_region
          %p201 = scmp.lt.s32.totalorder %s21, 1
          %s202 = scalar_select %p201, %s21, 1
          %s203 = smul.addr %s202, 8
          %s204 = scalar_lea.vmem %s0, %s203
        $region28: #{tpu_custom_call.1} parent=23 // pred_fallthru
          _
        // Predicated region
        $region29: #{tpu_custom_call.1} parent=23 // pred_check
          %p205 = pneg %p98
        $region30: #{tpu_custom_call.1} parent=23 // pred_check_branch
          %207 = sbr.rel (%p205) target = $region32
        $region31: #{tpu_custom_call.1} parent=23 // pred_region
          %p208 = scmp.lt.s32.totalorder %s21, 1
          %s209 = scalar_select %p208, %s21, 1
          %s210 = smul.addr %s209, 8
          %s211 = scalar_lea.vmem %s2, %s210
        $region32: #{tpu_custom_call.1} parent=23 // pred_fallthru
          _
      $region24: #{tpu_custom_call.1} parent=5 // pred_fallthru
        _
      %p212 = scmp.le.s32.totalorder 1, %s14
      %p213 = scmp.lt.s32.totalorder %s14, 3
      %p214 = pnand %p212, %p213
      %p215 = pneg %p214
      // Predicated region
      $region33: #{tpu_custom_call.1} parent=5 // pred_check
        _
      $region34: #{tpu_custom_call.1} parent=5 // pred_check_branch
        %217 = sbr.rel (%p214) target = $region36
      $region35: #{tpu_custom_call.1} parent=5 // pred_region
        %s218 = ssub.s32 %s14, 1
        // Predicated region
        $region37: #{tpu_custom_call.1} parent=35 // pred_check
          %p219 = pneg %p78
        $region38: #{tpu_custom_call.1} parent=35 // pred_check_branch
          %221 = sbr.rel (%p219) target = $region40
        $region39: #{tpu_custom_call.1} parent=35 // pred_region
          %222 = dma.done [#allocation3], 2048
        $region40: #{tpu_custom_call.1} parent=35 // pred_fallthru
          _
        %p223 = scmp.lt.s32.totalorder %s23, 1
        %s224 = scalar_select %p223, %s23, 1
        %s225 = smul.addr %s224, 8
        %s226 = scalar_lea.vmem %s0, %s225
        %p227 = pneg %p52
        %p228 = pneg %p49
        %p229 = pneg %p78
        %p230 = pneg %p75
        %p231 = scmp.lt.s32.totalorder %s23, 1
        %s232 = scalar_select %p231, %s23, 1
        %s233 = smul.addr %s232, 8
        %s234 = scalar_lea.vmem %s2, %s233
        %p235 = pneg %p104
        %p236 = pneg %p101
        %p237 = scmp.lt.s32.totalorder %s24, 0
        %s238 = scalar_select %p237, %s24, 0
        %s239 = scalar_lea.vmem %s3, %s238
        %p240 = pneg %p130
        %p241 = pneg %p127
        %p242 = pneg %p158
        %p243 = pneg %p155
        %s244 = sand.u32 %s145, 1
        %s245 = scalar_lea.sflag [#allocation4], %s244
        %s246 = sand.u32 %s145, 1
        %s247 = smul.addr %s246, 8
        %s248 = scalar_lea.vmem [#allocation5], %s247
        %p249 = scmp.lt.s32.totalorder %s23, 1
        %s250 = scalar_select %p249, %s23, 1
        %s251 = smul.addr %s250, 8
        %s252 = scalar_lea.vmem %s0, %s251
        %p253 = scmp.lt.s32.totalorder %s23, 1
        %s254 = scalar_select %p253, %s23, 1
        %s255 = smul.addr %s254, 8
        %s256 = scalar_lea.vmem %s2, %s255
        %p257 = scmp.lt.s32.totalorder %s24, 0
        %s258 = scalar_select %p257, %s24, 0
        %s259 = scalar_lea.vmem %s3, %s258
        %v260 = vld [vmem:[%s252] sm:$0xff]
        %v261 = vld [vmem:[#allocation2] sm:$0xff]
        %v262 = vld [vmem:[#allocation2 + $0x8] sm:$0xff]
        %v263 = vld [vmem:[#allocation2 + $0x10] sm:$0xff]
        %v264 = vld [vmem:[#allocation2 + $0x18] sm:$0xff]
        %v265 = vld [vmem:[#allocation2 + $0x20] sm:$0xff]
        %v266 = vld [vmem:[#allocation2 + $0x28] sm:$0xff]
        %v267 = vld [vmem:[#allocation2 + $0x30] sm:$0xff]
        %v268 = vld [vmem:[#allocation2 + $0x38] sm:$0xff]
        %v269 = vld [vmem:[#allocation2 + $0x40] sm:$0xff]
        %v270 = vld [vmem:[#allocation2 + $0x48] sm:$0xff]
        %v271 = vld [vmem:[#allocation2 + $0x50] sm:$0xff]
        %v272 = vld [vmem:[#allocation2 + $0x58] sm:$0xff]
        %v273 = vld [vmem:[#allocation2 + $0x60] sm:$0xff]
        %v274 = vld [vmem:[#allocation2 + $0x68] sm:$0xff]
        %v275 = vld [vmem:[#allocation2 + $0x70] sm:$0xff]
        %v276 = vld [vmem:[#allocation2 + $0x78] sm:$0xff]
        %277 = vmatprep.subr.mxu0 0.0
        %278 = vmatpush1.msra.mxu0 %v261
        %279 = vmatprep.subr.mxu0 0.0
        %280 = vmatpush1.msra.mxu0 %v262
        %281 = vmatprep.subr.mxu0 0.0
        %282 = vmatpush1.msra.mxu0 %v263
        %283 = vmatprep.subr.mxu0 0.0
        %284 = vmatpush1.msra.mxu0 %v264
        %285 = vmatprep.subr.mxu0 0.0
        %286 = vmatpush1.msra.mxu0 %v265
        %287 = vmatprep.subr.mxu0 0.0
        %288 = vmatpush1.msra.mxu0 %v266
        %289 = vmatprep.subr.mxu0 0.0
        %290 = vmatpush1.msra.mxu0 %v267
        %291 = vmatprep.subr.mxu0 0.0
        %292 = vmatpush1.msra.mxu0 %v268
        %293 = vmatprep.subr.mxu0 0.0
        %294 = vmatpush1.msra.mxu0 %v269
        %295 = vmatprep.subr.mxu0 0.0
        %296 = vmatpush1.msra.mxu0 %v270
        %297 = vmatprep.subr.mxu0 0.0
        %298 = vmatpush1.msra.mxu0 %v271
        %299 = vmatprep.subr.mxu0 0.0
        %300 = vmatpush1.msra.mxu0 %v272
        %301 = vmatprep.subr.mxu0 0.0
        %302 = vmatpush1.msra.mxu0 %v273
        %303 = vmatprep.subr.mxu0 0.0
        %304 = vmatpush1.msra.mxu0 %v274
        %305 = vmatprep.subr.mxu0 0.0
        %306 = vmatpush1.msra.mxu0 %v275
        %307 = vmatprep.subr.mxu0 0.0
        %308 = vmatpush1.msra.mxu0 %v276
        %309 = vmatprep.subr.mxu0 0.0
        %310 = vmatpush1.msra.mxu0 0.0
        %311 = vmatprep.subr.mxu0 0.0
        %312 = vmatpush1.msra.mxu0 0.0
        %313 = vmatprep.subr.mxu0 0.0
        %314 = vmatpush1.msra.mxu0 0.0
        %315 = vmatprep.subr.mxu0 0.0
        %316 = vmatpush1.msra.mxu0 0.0
        %317 = vmatprep.subr.mxu0 0.0
        %318 = vmatpush1.msra.mxu0 0.0
        %319 = vmatprep.subr.mxu0 0.0
        %320 = vmatpush1.msra.mxu0 0.0
        %321 = vmatprep.subr.mxu0 0.0
        %322 = vmatpush1.msra.mxu0 0.0
        %323 = vmatprep.subr.mxu0 0.0
        %324 = vmatpush1.msra.mxu0 0.0
        %325 = vmatprep.subr.mxu0 0.0
        %326 = vmatpush1.msra.mxu0 0.0
        %327 = vmatprep.subr.mxu0 0.0
        %328 = vmatpush1.msra.mxu0 0.0
        %329 = vmatprep.subr.mxu0 0.0
        %330 = vmatpush1.msra.mxu0 0.0
        %331 = vmatprep.subr.mxu0 0.0
        %332 = vmatpush1.msra.mxu0 0.0
        %333 = vmatprep.subr.mxu0 0.0
        %334 = vmatpush1.msra.mxu0 0.0
        %335 = vmatprep.subr.mxu0 0.0
        %336 = vmatpush1.msra.mxu0 0.0
        %337 = vmatprep.subr.mxu0 0.0
        %338 = vmatpush1.msra.mxu0 0.0
        %339 = vmatprep.subr.mxu0 0.0
        %340 = vmatpush1.msra.mxu0 0.0
        %341 = vmatprep.mubr.f32.mxu0 0.0
        %342 = vmatmul.mubr.f32.gmra.mrb[0].mxu0 %v260
        %v343 = vpop.f32.mrb[0].mxu0
        %v344 = vadd.f32 0.0, %v343
        %v345 = vpop.f32.mrb[0].mxu0
        %346 = vdwg.mxu0
        %v347 = vld [vmem:[%s256] sm:$0xff]
        %349 = vset.pattern.permute.xlu0 0
        %350 = vperm.xlu0 %349, %v347
        %v351 = vpop.permute.xlu0 %350
        %v353 = vmul.f32 %v344, %v351
        %v354 = vld [vmem:[%s259] sm:$0x1]
        %v356 = vlaneseq
        %v357 = vshrl.u32 %v356, 7
        %v358 = vsub.s32 0, %v357
        %v359 = vrot.slane %v354, %v358
        %v361 = vmul.f32 %v353, %v359
        %362 = vst [vmem:[%s248] sm:$0xff] %v361
        %s363 = sand.u32 %s145, 1
        %s364 = scalar_lea.sflag [#allocation4], %s363
        %s365 = sand.u32 %s145, 1
        %s366 = smul.addr %s365, 8
        %s367 = scalar_lea.vmem [#allocation5], %s366
        // Predicated region
        $region41: #{tpu_custom_call.1} parent=35 // pred_check
          %p368 = pneg %p155
        $region42: #{tpu_custom_call.1} parent=35 // pred_check_branch
          %370 = sbr.rel (%p368) target = $region44
        $region43: #{tpu_custom_call.1} parent=35 // pred_region
          %s372 = ssub.s32 128, 128
          %373 = vsyncadd %s364, %s372
          %s374 = sadd.s32 %s24, %s23
          %s375 = smul.addr %s374, 128
          %s376 = scalar_lea.hbm %s4, %s375
          %s378 = sshll.u32 %s367, 4
          %s379 = int_to_ptr.vmem [resolvable:$true] %s378
          %381 = dma.vmem_to_hbm [thread:$0]  %s379, 128, %s376, %s364
        $region44: #{tpu_custom_call.1} parent=35 // pred_fallthru
          _
      $region36: #{tpu_custom_call.1} parent=5 // pred_fallthru
        _
      %p382 = scmp.le.s32.totalorder 2, %s14
      // Predicated region
      $region45: #{tpu_custom_call.1} parent=5 // pred_check
        %p383 = pneg %p382
      $region46: #{tpu_custom_call.1} parent=5 // pred_check_branch
        %385 = sbr.rel (%p383) target = $region48
      $region47: #{tpu_custom_call.1} parent=5 // pred_region
        %s386 = ssub.s32 %s14, 2
        // Predicated region
        $region49: #{tpu_custom_call.1} parent=47 // pred_check
          %p387 = pneg %p161
        $region50: #{tpu_custom_call.1} parent=47 // pred_check_branch
          %389 = sbr.rel (%p387) target = $region52
        $region51: #{tpu_custom_call.1} parent=47 // pred_region
          %s390 = sand.u32 %s146, 1
          %s391 = scalar_lea.sflag [#allocation4], %s390
          %s392 = sand.u32 %s146, 1
          %s393 = smul.addr %s392, 8
          %s394 = scalar_lea.vmem [#allocation5], %s393
          %395 = dma.done %s391, 128
        $region52: #{tpu_custom_call.1} parent=47 // pred_fallthru
          _
      $region48: #{tpu_custom_call.1} parent=5 // pred_fallthru
        _
    $region6: #{tpu_custom_call.1} parent=1 // loop_footer
      %s18 = sadd.s32 1, %s14
    $region7: #{tpu_custom_call.1} parent=1 // loop_footer_branch
      %13 = sbr.rel target = $region3
    $region8: #{tpu_custom_call.1} parent=1 // loop_exit
      _
    %396 = vsyncpa [#allocation3], 1
    %s397 = scalar_lea.sflag [#allocation3], 1
    %398 = vsyncpa %s397, 1
    %399 = vsyncpa [#allocation4], 1
    %s400 = scalar_lea.sflag [#allocation4], 1
    %401 = vsyncpa %s400, 1

</llo_original>
